<compile_context>
chip_gen: v7x
topology: tpu7x:2x2x1
jax: 0.10.0
libtpu: 0.0.40
codegen_flags: <defaults>
</compile_context>

<pallas_src>
import functools

import jax
import jax.numpy as jnp
from jax.experimental import pallas as pl
from jax.experimental.pallas import tpu as pltpu


def _round_up(x: int, m: int) -> int:
    return ((x + m - 1) // m) * m


def convblock_kernel(x_ref, w_ref, b_ref, o_ref, *, pool_size: int):
    """One M-tile (TM pooled output positions) per grid step.

    x_ref: (pool_size, TM, K*C_in)  im2col rows, one slab per pool phase
    w_ref: (K*C_in, C_out)          unfolded conv weight (resident, bf16)
    b_ref: (1, C_out)               bias (f32)
    o_ref: (TM, C_out)              pooled + biased + ReLU'd output
    """
    w = w_ref[...]
    # MaxPool1d(pool, stride=pool) == running max over the per-phase conv
    # outputs; one MXU matmul per phase keeps the live f32 tile at TM x C_out.
    pooled = jnp.dot(x_ref[0], w, preferred_element_type=jnp.float32)
    for q in range(1, pool_size):
        pooled = jnp.maximum(
            pooled, jnp.dot(x_ref[q], w, preferred_element_type=jnp.float32))
    # bias + ReLU after pooling (per-channel bias + monotone ReLU commute).
    pooled = jnp.maximum(pooled + b_ref[...], 0.0)
    o_ref[...] = pooled.astype(o_ref.dtype)


def conv_block_forward(x, w, b, pool_size: int, *,
                       tile_m: int = 1024,
                       compute_dtype=jnp.bfloat16,
                       out_dtype=jnp.bfloat16,
                       channels_last: bool = False):
    """x: (N, C_in, L); w: (C_out, C_in, K); b: (C_out,).

    Returns (N, C_out, L // pool_size) (or (N, L_out, C_out) if channels_last).
    """
    n, c_in, l = x.shape
    c_out, _, k = w.shape
    assert k % 2 == 1, "'same'-padding math here requires an odd kernel size"
    pad = (k - 1) // 2
    l_out = l // pool_size               # floor-mode MaxPool1d (PyTorch default)
    m_out = n * l_out
    kc = k * c_in

    # ---- wrapper-side im2col: bf16 first, built directly phase-major ----
    # (N, C_in, L) -> padded NLC (N, L+2*pad, C_in), already in compute dtype
    # so every pass over the K-times-larger patch array is half-width.
    x_nlc = jnp.pad(x.astype(compute_dtype),
                    ((0, 0), (0, 0), (pad, pad))).transpose(0, 2, 1)
    span = (l_out - 1) * pool_size + 1
    phase_slabs = []
    for q in range(pool_size):
        # tap kk, phase q, pooled pos p: x_pad[n, ci, p*pool + q + kk]
        taps = [x_nlc[:, q + kk: q + kk + span: pool_size, :] for kk in range(k)]
        # slab[n*l_out + p, kk*C_in + ci]
        phase_slabs.append(jnp.stack(taps, axis=2).reshape(m_out, kc))
    x_unf = jnp.stack(phase_slabs, axis=0)              # (pool, m_out, kc)

    # Tile the pooled-row dimension; keep >=2 tiles when there is enough work
    # so both v7x TensorCores get a grid step ("parallel" axis).
    tm = min(tile_m, _round_up(m_out, 8))
    if m_out > 8 and m_out <= tm:
        tm = _round_up(-(-m_out // 2), 8)
    m_pad = _round_up(m_out, tm)
    if m_pad != m_out:
        x_unf = jnp.pad(x_unf, ((0, 0), (0, m_pad - m_out), (0, 0)))
    n_tiles = m_pad // tm

    # w_mat[(kk*C_in + ci), co] = w[co, ci, kk]  (matches the patch flattening)
    w_mat = jnp.transpose(w, (2, 1, 0)).reshape(kc, c_out).astype(compute_dtype)
    b_row = b.reshape(1, c_out).astype(jnp.float32)

    kernel = functools.partial(convblock_kernel, pool_size=pool_size)

    out = pl.pallas_call(
        kernel,
        out_shape=jax.ShapeDtypeStruct((m_pad, c_out), out_dtype),
        grid_spec=pltpu.PrefetchScalarGridSpec(
            num_scalar_prefetch=0,
            grid=(n_tiles,),
            in_specs=[
                pl.BlockSpec((pool_size, tm, kc), lambda i: (0, i, 0)),
                pl.BlockSpec((kc, c_out), lambda i: (0, 0)),
                pl.BlockSpec((1, c_out), lambda i: (0, 0)),
            ],
            out_specs=pl.BlockSpec((tm, c_out), lambda i: (i, 0)),
        ),
        compiler_params=pltpu.CompilerParams(
            dimension_semantics=("parallel",),
            vmem_limit_bytes=48 * 1024 * 1024,   # > v5e 16 MiB default, < v7x physical
        ),
    )(x_unf, w_mat, b_row)

    out = out[:m_out].reshape(n, l_out, c_out)           # (N, L_out, C_out)
    if channels_last:
        return out                                        # defer/skip transpose
    return out.transpose(0, 2, 1)                         # (N, C_out, L_out)


def reference_forward(x, w, b, pool_size: int):
    """Pure-JAX reference matching the PyTorch module (eval mode)."""
    k = w.shape[-1]
    pad = (k - 1) // 2
    y = jax.lax.conv_general_dilated(
        x, w, window_strides=(1,), padding=[(pad, pad)],
        dimension_numbers=("NCH", "OIH", "NCH"),
        precision=jax.lax.Precision.HIGHEST)
    y = y + b[None, :, None]
    y = jnp.maximum(y, 0.0)
    n, c, l = y.shape
    l_out = l // pool_size
    y = y[:, :, : l_out * pool_size].reshape(n, c, l_out, pool_size).max(axis=-1)
    return y


if __name__ == "__main__":
    # Small shapes using the module defaults (input_dim=4, out_dim=320,
    # kernel_size=15, pool_size=3) with a short sequence and batch=2.
    batch, c_in, length = 2, 4, 24
    c_out, k_size, pool = 320, 15, 3

    key = jax.random.PRNGKey(0)
    kx, kw, kb = jax.random.split(key, 3)

    x = jax.random.normal(kx, (batch, c_in, length), dtype=jnp.float32)

    # Deterministic PyTorch-style init: U(-bound, bound), bound = 1/sqrt(C_in*K).
    bound = 1.0 / (c_in * k_size) ** 0.5
    w = jax.random.uniform(kw, (c_out, c_in, k_size), jnp.float32, -bound, bound)
    b = jax.random.uniform(kb, (c_out,), jnp.float32, -bound, bound)

    out = conv_block_forward(x, w, b, pool)
    out = jax.block_until_ready(out)

    ref = reference_forward(x, w, b, pool)
    assert out.shape == (batch, c_out, length // pool), out.shape

    # bf16 MXU inputs + bf16 output with f32 accumulation -> loosened tolerance
    # vs the f32 reference.
    out_f32 = out.astype(jnp.float32)
    max_err = float(jnp.max(jnp.abs(out_f32 - ref)))
    assert jnp.allclose(out_f32, ref, atol=5e-2, rtol=5e-2), max_err

    print("KERNEL_OK")
</pallas_src>

<mosaic_0001>
module attributes {stable_mosaic.version = 11 : i64} {
  func.func @convblock_kernel(%arg0: i32, %arg1: memref<3x8x60xbf16, #tpu.memory_space<vmem>>, %arg2: memref<60x320xbf16, #tpu.memory_space<vmem>>, %arg3: memref<1x320xf32, #tpu.memory_space<vmem>>, %arg4: memref<8x320xbf16, #tpu.memory_space<vmem>>) attributes {dimension_semantics = [#tpu.dimension_semantics<parallel>], iteration_bounds = array<i64: 2>, scalar_prefetch = 0 : i64, scratch_operands = 0 : i64, tpu.core_type = #tpu.core_type<tc>, window_params = [{transform_indices = @transform_0, window_bounds = array<i64: 3, 8, 60>}, {pipeline_mode = #tpu.pipeline_mode<synchronous>, transform_indices = @transform_1, window_bounds = array<i64: 60, 320>}, {pipeline_mode = #tpu.pipeline_mode<synchronous>, transform_indices = @transform_2, window_bounds = array<i64: 1, 320>}, {transform_indices = @transform_3, window_bounds = array<i64: 8, 320>}]} {
    %c0 = arith.constant 0 : index
    %c0_0 = arith.constant 0 : index
    %0 = vector.load %arg2[%c0, %c0_0] : memref<60x320xbf16, #tpu.memory_space<vmem>>, vector<60x320xbf16>
    %c0_1 = arith.constant 0 : index
    %c0_2 = arith.constant 0 : index
    %c0_3 = arith.constant 0 : index
    %1 = vector.load %arg1[%c0_1, %c0_2, %c0_3] : memref<3x8x60xbf16, #tpu.memory_space<vmem>>, vector<1x8x60xbf16>
    %2 = vector.shape_cast %1 : vector<1x8x60xbf16> to vector<8x60xbf16>
    %cst = arith.constant dense<0.000000e+00> : vector<8x320xf32>
    %3 = tpu.matmul %2, %0, %cst {dimension_numbers = #tpu.dot_dimension_numbers<[1], [0], [0], [1], [0, 0, 1, 1], [], []>} : vector<8x60xbf16>, vector<60x320xbf16>, vector<8x320xf32> -> vector<8x320xf32>
    %c1 = arith.constant 1 : index
    %c0_4 = arith.constant 0 : index
    %c0_5 = arith.constant 0 : index
    %4 = vector.load %arg1[%c1, %c0_4, %c0_5] : memref<3x8x60xbf16, #tpu.memory_space<vmem>>, vector<1x8x60xbf16>
    %5 = vector.shape_cast %4 : vector<1x8x60xbf16> to vector<8x60xbf16>
    %cst_6 = arith.constant dense<0.000000e+00> : vector<8x320xf32>
    %6 = tpu.matmul %5, %0, %cst_6 {dimension_numbers = #tpu.dot_dimension_numbers<[1], [0], [0], [1], [0, 0, 1, 1], [], []>} : vector<8x60xbf16>, vector<60x320xbf16>, vector<8x320xf32> -> vector<8x320xf32>
    %7 = arith.maximumf %3, %6 : vector<8x320xf32>
    %c2 = arith.constant 2 : index
    %c0_7 = arith.constant 0 : index
    %c0_8 = arith.constant 0 : index
    %8 = vector.load %arg1[%c2, %c0_7, %c0_8] : memref<3x8x60xbf16, #tpu.memory_space<vmem>>, vector<1x8x60xbf16>
    %9 = vector.shape_cast %8 : vector<1x8x60xbf16> to vector<8x60xbf16>
    %cst_9 = arith.constant dense<0.000000e+00> : vector<8x320xf32>
    %10 = tpu.matmul %9, %0, %cst_9 {dimension_numbers = #tpu.dot_dimension_numbers<[1], [0], [0], [1], [0, 0, 1, 1], [], []>} : vector<8x60xbf16>, vector<60x320xbf16>, vector<8x320xf32> -> vector<8x320xf32>
    %11 = arith.maximumf %7, %10 : vector<8x320xf32>
    %c0_10 = arith.constant 0 : index
    %c0_11 = arith.constant 0 : index
    %12 = vector.load %arg3[%c0_10, %c0_11] : memref<1x320xf32, #tpu.memory_space<vmem>>, vector<1x320xf32>
    %13 = vector.broadcast %12 : vector<1x320xf32> to vector<8x320xf32>
    %14 = arith.addf %11, %13 : vector<8x320xf32>
    %cst_12 = arith.constant 0.000000e+00 : f32
    %15 = vector.broadcast %cst_12 : f32 to vector<8x320xf32>
    %16 = arith.maximumf %14, %15 : vector<8x320xf32>
    %17 = arith.truncf %16 : vector<8x320xf32> to vector<8x320xbf16>
    %c0_13 = arith.constant 0 : index
    %c0_14 = arith.constant 0 : index
    %18 = vector.load %arg4[%c0_13, %c0_14] : memref<8x320xbf16, #tpu.memory_space<vmem>>, vector<8x320xbf16>
    tpu.vector_store %arg4[%c0_13, %c0_14], %17 {strides = array<i32>} : memref<8x320xbf16, #tpu.memory_space<vmem>>, vector<8x320xbf16>,
    return
  }
  func.func @transform_0(%arg0: i32) -> (i32, i32, i32) {
    %c0_i32 = arith.constant 0 : i32
    %c0_i32_0 = arith.constant 0 : i32
    %c0_i32_1 = arith.constant 0 : i32
    return %c0_i32, %arg0, %c0_i32_0 : i32, i32, i32
  }
  func.func @transform_1(%arg0: i32) -> (i32, i32) {
    %c0_i32 = arith.constant 0 : i32
    %c0_i32_0 = arith.constant 0 : i32
    %c0_i32_1 = arith.constant 0 : i32
    return %c0_i32, %c0_i32_0 : i32, i32
  }
  func.func @transform_2(%arg0: i32) -> (i32, i32) {
    %c0_i32 = arith.constant 0 : i32
    %c0_i32_0 = arith.constant 0 : i32
    %c0_i32_1 = arith.constant 0 : i32
    return %c0_i32, %c0_i32_0 : i32, i32
  }
  func.func @transform_3(%arg0: i32) -> (i32, i32) {
    %c0_i32 = arith.constant 0 : i32
    %c0_i32_0 = arith.constant 0 : i32
    return %arg0, %c0_i32 : i32, i32
  }
}

</mosaic_0001>

<llo_original>
// kernel: tpu_custom_call.1
$region0: #{tpu_custom_call.1}
  #allocation0 [shape = 'u32[]', space=smem, size = 0x4, offset = 0x4, fixed_abs, tag = 'smem constant byte address 0x4 - core index']
  #allocation1 [shape = 'u32[144,128]{1,0:T(1,128)}', space=vmem, size = 0x12000, scoped, tag = 'internal scratch']
  %s0 = inlined_call_operand.hbm [shape: bf16[3,16,60], index: 0, kind: input, shape index: {}]
  %s1 = inlined_call_operand.hbm [shape: bf16[60,320], index: 1, kind: input, shape index: {}]
  %s2 = inlined_call_operand.vmem [shape: f32[1,320], index: 2, kind: input, shape index: {}]
  %s3 = inlined_call_operand.hbm [shape: bf16[16,320], index: 3, kind: output, shape index: {}]
  %s4 = sld [smem:[#allocation0]]
  $region53: #{tpu_custom_call.1} parent=0
    _
  %s6 = ssub.s32 1, %s4
  %s7 = scalar_select 0, %s6, %s4
  $region1: #{tpu_custom_call.1} parent=0
    #allocation2 [shape = 'u8[12288]{0}', space=vmem, size = 0x3000, scoped, tag = 'input window, operand 0']
    #allocation3 [shape = 's32[2]{0}', space=sflag, size = 0x8, scoped, tag = 'scoped memory for tpu_custom_call.1']
    #allocation4 [shape = 's32[2]{0}', space=sflag, size = 0x8, scoped, tag = 'scoped memory for tpu_custom_call.1']
    #allocation5 [shape = 'u8[49152]{0}', space=vmem, size = 0xc000, scoped, tag = 'input window, operand 1, single buffered']
    #allocation6 [shape = 's32[1]{0}', space=sflag, size = 0x4, scoped, tag = 'scoped memory for tpu_custom_call.1']
    #allocation7 [shape = 'u8[12288]{0}', space=vmem, size = 0x3000, scoped, tag = 'output window, operand 0']
    %8 = vsyncpa [#allocation3], 0
    %s9 = scalar_lea.sflag [#allocation3], 1
    %10 = vsyncpa %s9, 0
    %11 = vsyncpa [#allocation6], 0
    %12 = vsyncpa [#allocation4], 0
    %s13 = scalar_lea.sflag [#allocation4], 1
    %14 = vsyncpa %s13, 0
    loop: start=0, step=1, limit=4
    $region2: #{tpu_custom_call.1} parent=1 // loop_pre_header
      _
    $region3: #{tpu_custom_call.1} parent=1 // loop_header
      %s16 = sphi 0, %s20
      %p17 = scmp.ge.s32.totalorder %s16, 4
      %s26 = sphi 0, %s28
      %s29 = sphi 0, %s26
      %s30 = sphi 0, %s29
      %s46 = sphi 0, %s30
      %s50 = sphi 0, %s50
      %s52 = sphi 0, %s50
      %s53 = sphi 0, %s52
      %s67 = sphi 0, %s53
      %s71 = sphi 0, %s71
      %s73 = sphi 0, %s71
      %s74 = sphi 0, %s73
      %s88 = sphi 0, %s74
      %s94 = sphi 0, %s96
      %s97 = sphi 0, %s94
      %s98 = sphi 0, %s97
      %s114 = sphi 0, %s98
    $region4: #{tpu_custom_call.1} parent=1 // loop_header_branch
      %19 = sbr.rel (%p17) target = $region8
    $region5: #{tpu_custom_call.1} parent=1 // loop_body
      %s21 = ssub.s32 %s16, 1
      %s22 = ssub.s32 %s16, 2
      %s23 = sadd.s32 %s16, 1
      %s24 = ssub.s32 %s16, %s23
      %p25 = scmp.eq.s32.totalorder %s24, 0
      %s27 = sadd.s32 %s26, 1
      %s28 = scalar_select %p25, %s26, %s27
      %p31 = pneg %p25
      %p32 = scmp.eq.s32.totalorder %s16, 1
      %p33 = por %p31, %p32
      %p34 = scmp.ne.s32.totalorder %s26, %s29
      %p35 = scmp.eq.s32.totalorder %s16, 0
      %p36 = por %p34, %p35
      %p37 = scmp.ne.s32.totalorder %s26, %s29
      %p38 = scmp.eq.s32.totalorder %s21, 1
      %p39 = por %p37, %p38
      %p40 = scmp.ne.s32.totalorder %s29, %s30
      %p41 = scmp.eq.s32.totalorder %s21, 0
      %p42 = por %p40, %p41
      %p43 = scmp.ne.s32.totalorder %s29, %s30
      %p44 = scmp.eq.s32.totalorder %s22, 1
      %p45 = por %p43, %p44
      %p47 = scmp.ne.s32.totalorder %s30, %s46
      %p48 = scmp.eq.s32.totalorder %s22, 0
      %p49 = por %p47, %p48
      %s51 = sadd.s32 %s50, 1
      %p54 = scmp.eq.s32.totalorder %s16, 1
      %p55 = scmp.ne.s32.totalorder %s50, %s52
      %p56 = scmp.eq.s32.totalorder %s16, 0
      %p57 = por %p55, %p56
      %p58 = scmp.ne.s32.totalorder %s50, %s52
      %p59 = scmp.eq.s32.totalorder %s21, 1
      %p60 = por %p58, %p59
      %p61 = scmp.ne.s32.totalorder %s52, %s53
      %p62 = scmp.eq.s32.totalorder %s21, 0
      %p63 = por %p61, %p62
      %p64 = scmp.ne.s32.totalorder %s52, %s53
      %p65 = scmp.eq.s32.totalorder %s22, 1
      %p66 = por %p64, %p65
      %p68 = scmp.ne.s32.totalorder %s53, %s67
      %p69 = scmp.eq.s32.totalorder %s22, 0
      %p70 = por %p68, %p69
      %s72 = sadd.s32 %s71, 1
      %p75 = scmp.eq.s32.totalorder %s16, 1
      %p76 = scmp.ne.s32.totalorder %s71, %s73
      %p77 = scmp.eq.s32.totalorder %s16, 0
      %p78 = por %p76, %p77
      %p79 = scmp.ne.s32.totalorder %s71, %s73
      %p80 = scmp.eq.s32.totalorder %s21, 1
      %p81 = por %p79, %p80
      %p82 = scmp.ne.s32.totalorder %s73, %s74
      %p83 = scmp.eq.s32.totalorder %s21, 0
      %p84 = por %p82, %p83
      %p85 = scmp.ne.s32.totalorder %s73, %s74
      %p86 = scmp.eq.s32.totalorder %s22, 1
      %p87 = por %p85, %p86
      %p89 = scmp.ne.s32.totalorder %s74, %s88
      %p90 = scmp.eq.s32.totalorder %s22, 0
      %p91 = por %p89, %p90
      %s92 = ssub.s32 %s16, %s23
      %p93 = scmp.eq.s32.totalorder %s92, 0
      %s95 = sadd.s32 %s94, 1
      %s96 = scalar_select %p93, %s94, %s95
      %p99 = pneg %p93
      %p100 = scmp.eq.s32.totalorder %s16, 1
      %p101 = por %p99, %p100
      %p102 = scmp.ne.s32.totalorder %s94, %s97
      %p103 = scmp.eq.s32.totalorder %s16, 0
      %p104 = por %p102, %p103
      %p105 = scmp.ne.s32.totalorder %s94, %s97
      %p106 = scmp.eq.s32.totalorder %s21, 1
      %p107 = por %p105, %p106
      %p108 = scmp.ne.s32.totalorder %s97, %s98
      %p109 = scmp.eq.s32.totalorder %s21, 0
      %p110 = por %p108, %p109
      %p111 = scmp.ne.s32.totalorder %s97, %s98
      %p112 = scmp.eq.s32.totalorder %s22, 1
      %p113 = por %p111, %p112
      %p115 = scmp.ne.s32.totalorder %s98, %s114
      %p116 = scmp.eq.s32.totalorder %s22, 0
      %p117 = por %p115, %p116
      %p118 = scmp.le.s32.totalorder 1, %s16
      %p119 = scmp.lt.s32.totalorder %s16, 3
      %p120 = pnand %p118, %p119
      %p121 = pneg %p120
      // Predicated region
      $region9: #{tpu_custom_call.1} parent=5 // pred_check
        _
      $region10: #{tpu_custom_call.1} parent=5 // pred_check_branch
        %123 = sbr.rel (%p120) target = $region12
      $region11: #{tpu_custom_call.1} parent=5 // pred_region
        %s124 = ssub.s32 %s16, 1
        // Predicated region
        $region13: #{tpu_custom_call.1} parent=11 // pred_check
          %p125 = pneg %p63
        $region14: #{tpu_custom_call.1} parent=11 // pred_check_branch
          %127 = sbr.rel (%p125) target = $region16
        $region15: #{tpu_custom_call.1} parent=11 // pred_region
          %s129 = ssub.s32 1536, 1536
          %130 = vsyncadd [#allocation6], %s129
          %s131 = sshll.u32 [#allocation5], 4
          %s132 = int_to_ptr.vmem [resolvable:$true] %s131
          %137 = dma.hbm_to_vmem [thread:$0]  %s1, 1536, %s132, [#allocation6], 192, 192, 12
        $region16: #{tpu_custom_call.1} parent=11 // pred_fallthru
          _
        // Predicated region
        $region17: #{tpu_custom_call.1} parent=11 // pred_check
          %p138 = pneg %p84
        $region18: #{tpu_custom_call.1} parent=11 // pred_check_branch
          %140 = sbr.rel (%p138) target = $region20
        $region19: #{tpu_custom_call.1} parent=11 // pred_region
          _
        $region20: #{tpu_custom_call.1} parent=11 // pred_fallthru
          _
      $region12: #{tpu_custom_call.1} parent=5 // pred_fallthru
        _
      %p141 = scmp.lt.s32.totalorder %s16, 2
      // Predicated region
      $region21: #{tpu_custom_call.1} parent=5 // pred_check
        %p142 = pneg %p141
      $region22: #{tpu_custom_call.1} parent=5 // pred_check_branch
        %144 = sbr.rel (%p142) target = $region24
      $region23: #{tpu_custom_call.1} parent=5 // pred_region
        // Predicated region
        $region25: #{tpu_custom_call.1} parent=23 // pred_check
          %p145 = pneg %p36
        $region26: #{tpu_custom_call.1} parent=23 // pred_check_branch
          %147 = sbr.rel (%p145) target = $region28
        $region27: #{tpu_custom_call.1} parent=23 // pred_region
          %s148 = sand.u32 %s26, 1
          %s149 = scalar_lea.sflag [#allocation3], %s148
          %s150 = sand.u32 %s26, 1
          %s151 = smul.addr %s150, 12
          %s152 = scalar_lea.vmem [#allocation2], %s151
          %s154 = ssub.s32 192, 192
          %155 = vsyncadd %s149, %s154
          %s156 = smul.addr %s16, 64
          %s157 = scalar_lea.hbm %s0, %s156
          %s158 = sshll.u32 %s152, 4
          %s159 = int_to_ptr.vmem [resolvable:$true] %s158
          %164 = dma.hbm_to_vmem [thread:$0]  %s157, 192, %s159, %s149, 128, 64, 4
        $region28: #{tpu_custom_call.1} parent=23 // pred_fallthru
          _
      $region24: #{tpu_custom_call.1} parent=5 // pred_fallthru
        _
      %p165 = scmp.le.s32.totalorder 1, %s16
      %p166 = scmp.lt.s32.totalorder %s16, 3
      %p167 = pnand %p165, %p166
      %p168 = pneg %p167
      // Predicated region
      $region29: #{tpu_custom_call.1} parent=5 // pred_check
        _
      $region30: #{tpu_custom_call.1} parent=5 // pred_check_branch
        %170 = sbr.rel (%p167) target = $region32
      $region31: #{tpu_custom_call.1} parent=5 // pred_region
        %s171 = ssub.s32 %s16, 1
        %s172 = sand.u32 %s29, 1
        %s173 = scalar_lea.sflag [#allocation3], %s172
        %s174 = sand.u32 %s29, 1
        %s175 = smul.addr %s174, 12
        %s176 = scalar_lea.vmem [#allocation2], %s175
        // Predicated region
        $region33: #{tpu_custom_call.1} parent=31 // pred_check
          %p177 = pneg %p42
        $region34: #{tpu_custom_call.1} parent=31 // pred_check_branch
          %179 = sbr.rel (%p177) target = $region36
        $region35: #{tpu_custom_call.1} parent=31 // pred_region
          %180 = dma.done %s173, 192
        $region36: #{tpu_custom_call.1} parent=31 // pred_fallthru
          _
        // Predicated region
        $region37: #{tpu_custom_call.1} parent=31 // pred_check
          %p181 = pneg %p63
        $region38: #{tpu_custom_call.1} parent=31 // pred_check_branch
          %183 = sbr.rel (%p181) target = $region40
        $region39: #{tpu_custom_call.1} parent=31 // pred_region
          %184 = dma.done [#allocation6], 1536
        $region40: #{tpu_custom_call.1} parent=31 // pred_fallthru
          _
        %s185 = sand.u32 %s29, 1
        %s186 = scalar_lea.sflag [#allocation3], %s185
        %s187 = sand.u32 %s29, 1
        %s188 = smul.addr %s187, 12
        %s189 = scalar_lea.vmem [#allocation2], %s188
        %p190 = pneg %p42
        %p191 = pneg %p39
        %p192 = pneg %p63
        %p193 = pneg %p60
        %p194 = pneg %p84
        %p195 = pneg %p81
        %p196 = pneg %p110
        %p197 = pneg %p107
        %s198 = sand.u32 %s97, 1
        %s199 = scalar_lea.sflag [#allocation4], %s198
        %s200 = sand.u32 %s97, 1
        %s201 = smul.addr %s200, 12
        %s202 = scalar_lea.vmem [#allocation7], %s201
        %v204 = vld [vmem:[#allocation5] sm:$0xff]
        %v205 = vld [vmem:[#allocation5 + $0x8] sm:$0xf]
        %v206 = vld [vmem:[#allocation5 + $0xc] sm:$0xff]
        %v207 = vld [vmem:[#allocation5 + $0x14] sm:$0xf]
        %v208 = vld [vmem:[#allocation5 + $0x18] sm:$0xff]
        %v209 = vld [vmem:[#allocation5 + $0x20] sm:$0xf]
        %v210 = vld [vmem:[#allocation5 + $0x24] sm:$0xff]
        %v211 = vld [vmem:[#allocation5 + $0x2c] sm:$0xf]
        %v212 = vld [vmem:[#allocation5 + $0x30] sm:$0xff]
        %v213 = vld [vmem:[#allocation5 + $0x38] sm:$0xf]
        %v214 = vld [vmem:[#allocation5 + $0x3c] sm:$0xff]
        %v215 = vld [vmem:[#allocation5 + $0x44] sm:$0xf]
        %v216 = vld [vmem:[#allocation5 + $0x48] sm:$0xff]
        %v217 = vld [vmem:[#allocation5 + $0x50] sm:$0xf]
        %v218 = vld [vmem:[#allocation5 + $0x54] sm:$0x33]
        %v219 = vld [vmem:[#allocation5 + $0x5c] sm:$0x3]
        %v220 = vld [vmem:[%s176] sm:$0xf]
        %v237 = vunpack.c.l.b16 %v204
        %v238 = vunpack.c.h.b16 %v204
        %v239 = vunpack.c.l.b16 %v205
        %v240 = vunpack.c.l.b16 %v206
        %v241 = vunpack.c.h.b16 %v206
        %v242 = vunpack.c.l.b16 %v207
        %v243 = vunpack.c.l.b16 %v208
        %v244 = vunpack.c.h.b16 %v208
        %v245 = vunpack.c.l.b16 %v209
        %v246 = vunpack.c.l.b16 %v210
        %v247 = vunpack.c.h.b16 %v210
        %v248 = vunpack.c.l.b16 %v211
        %v249 = vunpack.c.l.b16 %v212
        %v250 = vunpack.c.h.b16 %v212
        %v251 = vunpack.c.l.b16 %v213
        %v252 = vunpack.c.l.b16 %v214
        %v253 = vunpack.c.h.b16 %v214
        %v254 = vunpack.c.l.b16 %v215
        %v255 = vunpack.c.l.b16 %v216
        %v256 = vunpack.c.h.b16 %v216
        %v257 = vunpack.c.l.b16 %v217
        %v258 = vunpack.c.l.b16 %v218
        %v259 = vunpack.c.h.b16 %v218
        %v260 = vunpack.c.l.b16 %v219
        %v261 = vpack.c.b16 %v240, %v237
        %v262 = vpack.c.b16 %v241, %v238
        %v263 = vpack.c.b16 %v242, %v239
        %v264 = vpack.c.b16 %v246, %v243
        %v265 = vpack.c.b16 %v247, %v244
        %v266 = vpack.c.b16 %v248, %v245
        %v267 = vpack.c.b16 %v252, %v249
        %v268 = vpack.c.b16 %v253, %v250
        %v269 = vpack.c.b16 %v254, %v251
        %v270 = vpack.c.b16 %v258, %v255
        %v271 = vpack.c.b16 %v259, %v256
        %v272 = vpack.c.b16 %v260, %v257
        %vm282 = vcmask 490496
        %v284 = vsel %vm282, %v220, 0
        %vm286 = vcmask 1045504
        %v288 = vsel %vm286, %v270, 0
        %v291 = vsel %vm286, %v271, 0
        %v294 = vsel %vm286, %v272, 0
        %296 = vmatprep.subr.bf16.mxu0 %v262
        %297 = vmatpush1.bf16.msra.mxu0 %v261
        %298 = vmatprep.subr.bf16.mxu0 %v265
        %299 = vmatpush1.bf16.msra.mxu0 %v264
        %300 = vmatprep.subr.bf16.mxu0 %v268
        %301 = vmatpush1.bf16.msra.mxu0 %v267
        %302 = vmatprep.subr.bf16.mxu0 %v291
        %303 = vmatpush1.bf16.msra.mxu0 %v288
        %304 = vmatprep.subr.bf16.mxu0 0
        %305 = vmatpush1.bf16.msra.mxu0 0
        %306 = vmatprep.subr.bf16.mxu0 0
        %307 = vmatpush1.bf16.msra.mxu0 0
        %308 = vmatprep.subr.bf16.mxu0 0
        %309 = vmatpush1.bf16.msra.mxu0 0
        %310 = vmatprep.subr.bf16.mxu0 0
        %311 = vmatpush1.bf16.msra.mxu0 0
        %312 = vmatprep.subr.bf16.mxu0 0
        %313 = vmatpush1.bf16.msra.mxu0 0
        %314 = vmatprep.subr.bf16.mxu0 0
        %315 = vmatpush1.bf16.msra.mxu0 0
        %316 = vmatprep.subr.bf16.mxu0 0
        %317 = vmatpush1.bf16.msra.mxu0 0
        %318 = vmatprep.subr.bf16.mxu0 0
        %319 = vmatpush1.bf16.msra.mxu0 0
        %320 = vmatprep.subr.bf16.mxu0 0
        %321 = vmatpush1.bf16.msra.mxu0 0
        %322 = vmatprep.subr.bf16.mxu0 0
        %323 = vmatpush1.bf16.msra.mxu0 0
        %324 = vmatprep.subr.bf16.mxu0 0
        %325 = vmatpush1.bf16.msra.mxu0 0
        %326 = vmatprep.subr.bf16.mxu0 0
        %327 = vmatpush1.bf16.msra.mxu0 0
        %328 = vmatprep.mubr.bf16.mxu0 0
        %329 = vmatmul.mubr.bf16.gmra.mrb[0].mxu0 %v284
        %v330 = vpop.f32.mrb[0].mxu0
        %v331 = vadd.f32 0.0, %v330
        %v332 = vpop.f32.mrb[0].mxu0
        %v333 = vadd.f32 0.0, %v332
        %v334 = vpop.f32.mrb[0].mxu0
        %v335 = vpop.f32.mrb[0].mxu0
        %336 = vdwg.mxu0
        %337 = vmatprep.subr.bf16.mxu0 0
        %338 = vmatpush1.bf16.msra.mxu0 %v263
        %339 = vmatprep.subr.bf16.mxu0 0
        %340 = vmatpush1.bf16.msra.mxu0 %v266
        %341 = vmatprep.subr.bf16.mxu0 0
        %342 = vmatpush1.bf16.msra.mxu0 %v269
        %343 = vmatprep.subr.bf16.mxu0 0
        %344 = vmatpush1.bf16.msra.mxu0 %v294
        %345 = vmatprep.subr.bf16.mxu0 0
        %346 = vmatpush1.bf16.msra.mxu0 0
        %347 = vmatprep.subr.bf16.mxu0 0
        %348 = vmatpush1.bf16.msra.mxu0 0
        %349 = vmatprep.subr.bf16.mxu0 0
        %350 = vmatpush1.bf16.msra.mxu0 0
        %351 = vmatprep.subr.bf16.mxu0 0
        %352 = vmatpush1.bf16.msra.mxu0 0
        %353 = vmatprep.subr.bf16.mxu0 0
        %354 = vmatpush1.bf16.msra.mxu0 0
        %355 = vmatprep.subr.bf16.mxu0 0
        %356 = vmatpush1.bf16.msra.mxu0 0
        %357 = vmatprep.subr.bf16.mxu0 0
        %358 = vmatpush1.bf16.msra.mxu0 0
        %359 = vmatprep.subr.bf16.mxu0 0
        %360 = vmatpush1.bf16.msra.mxu0 0
        %361 = vmatprep.subr.bf16.mxu0 0
        %362 = vmatpush1.bf16.msra.mxu0 0
        %363 = vmatprep.subr.bf16.mxu0 0
        %364 = vmatpush1.bf16.msra.mxu0 0
        %365 = vmatprep.subr.bf16.mxu0 0
        %366 = vmatpush1.bf16.msra.mxu0 0
        %367 = vmatprep.subr.bf16.mxu0 0
        %368 = vmatpush1.bf16.msra.mxu0 0
        %369 = vmatprep.mubr.bf16.mxu0 0
        %370 = vmatmul.mubr.bf16.gmra.mrb[0].mxu0 %v284
        %v371 = vpop.f32.mrb[0].mxu0
        %v372 = vadd.f32 0.0, %v371
        %v373 = vpop.f32.mrb[0].mxu0
        %v374 = vpop.f32.mrb[0].mxu0
        %v375 = vpop.f32.mrb[0].mxu0
        %376 = vdwg.mxu0
        %s377 = scalar_lea.vmem %s176, 4 [#allocation2]
        %v378 = vld [vmem:[%s377] sm:$0xf]
        %v380 = vsel %vm282, %v378, 0
        %382 = vmatprep.subr.bf16.mxu0 %v262
        %383 = vmatpush1.bf16.msra.mxu0 %v261
        %384 = vmatprep.subr.bf16.mxu0 %v265
        %385 = vmatpush1.bf16.msra.mxu0 %v264
        %386 = vmatprep.subr.bf16.mxu0 %v268
        %387 = vmatpush1.bf16.msra.mxu0 %v267
        %388 = vmatprep.subr.bf16.mxu0 %v291
        %389 = vmatpush1.bf16.msra.mxu0 %v288
        %390 = vmatprep.subr.bf16.mxu0 0
        %391 = vmatpush1.bf16.msra.mxu0 0
        %392 = vmatprep.subr.bf16.mxu0 0
        %393 = vmatpush1.bf16.msra.mxu0 0
        %394 = vmatprep.subr.bf16.mxu0 0
        %395 = vmatpush1.bf16.msra.mxu0 0
        %396 = vmatprep.subr.bf16.mxu0 0
        %397 = vmatpush1.bf16.msra.mxu0 0
        %398 = vmatprep.subr.bf16.mxu0 0
        %399 = vmatpush1.bf16.msra.mxu0 0
        %400 = vmatprep.subr.bf16.mxu0 0
        %401 = vmatpush1.bf16.msra.mxu0 0
        %402 = vmatprep.subr.bf16.mxu0 0
        %403 = vmatpush1.bf16.msra.mxu0 0
        %404 = vmatprep.subr.bf16.mxu0 0
        %405 = vmatpush1.bf16.msra.mxu0 0
        %406 = vmatprep.subr.bf16.mxu0 0
        %407 = vmatpush1.bf16.msra.mxu0 0
        %408 = vmatprep.subr.bf16.mxu0 0
        %409 = vmatpush1.bf16.msra.mxu0 0
        %410 = vmatprep.subr.bf16.mxu0 0
        %411 = vmatpush1.bf16.msra.mxu0 0
        %412 = vmatprep.subr.bf16.mxu0 0
        %413 = vmatpush1.bf16.msra.mxu0 0
        %414 = vmatprep.mubr.bf16.mxu0 0
        %415 = vmatmul.mubr.bf16.gmra.mrb[0].mxu0 %v380
        %v416 = vpop.f32.mrb[0].mxu0
        %v417 = vadd.f32 0.0, %v416
        %v418 = vpop.f32.mrb[0].mxu0
        %v419 = vadd.f32 0.0, %v418
        %v420 = vpop.f32.mrb[0].mxu0
        %v421 = vpop.f32.mrb[0].mxu0
        %422 = vdwg.mxu0
        %423 = vmatprep.subr.bf16.mxu0 0
        %424 = vmatpush1.bf16.msra.mxu0 %v263
        %425 = vmatprep.subr.bf16.mxu0 0
        %426 = vmatpush1.bf16.msra.mxu0 %v266
        %427 = vmatprep.subr.bf16.mxu0 0
        %428 = vmatpush1.bf16.msra.mxu0 %v269
        %429 = vmatprep.subr.bf16.mxu0 0
        %430 = vmatpush1.bf16.msra.mxu0 %v294
        %431 = vmatprep.subr.bf16.mxu0 0
        %432 = vmatpush1.bf16.msra.mxu0 0
        %433 = vmatprep.subr.bf16.mxu0 0
        %434 = vmatpush1.bf16.msra.mxu0 0
        %435 = vmatprep.subr.bf16.mxu0 0
        %436 = vmatpush1.bf16.msra.mxu0 0
        %437 = vmatprep.subr.bf16.mxu0 0
        %438 = vmatpush1.bf16.msra.mxu0 0
        %439 = vmatprep.subr.bf16.mxu0 0
        %440 = vmatpush1.bf16.msra.mxu0 0
        %441 = vmatprep.subr.bf16.mxu0 0
        %442 = vmatpush1.bf16.msra.mxu0 0
        %443 = vmatprep.subr.bf16.mxu0 0
        %444 = vmatpush1.bf16.msra.mxu0 0
        %445 = vmatprep.subr.bf16.mxu0 0
        %446 = vmatpush1.bf16.msra.mxu0 0
        %447 = vmatprep.subr.bf16.mxu0 0
        %448 = vmatpush1.bf16.msra.mxu0 0
        %449 = vmatprep.subr.bf16.mxu0 0
        %450 = vmatpush1.bf16.msra.mxu0 0
        %451 = vmatprep.subr.bf16.mxu0 0
        %452 = vmatpush1.bf16.msra.mxu0 0
        %453 = vmatprep.subr.bf16.mxu0 0
        %454 = vmatpush1.bf16.msra.mxu0 0
        %455 = vmatprep.mubr.bf16.mxu0 0
        %456 = vmatmul.mubr.bf16.gmra.mrb[0].mxu0 %v380
        %v457 = vpop.f32.mrb[0].mxu0
        %v458 = vadd.f32 0.0, %v457
        %v459 = vpop.f32.mrb[0].mxu0
        %v460 = vpop.f32.mrb[0].mxu0
        %v461 = vpop.f32.mrb[0].mxu0
        %462 = vdwg.mxu0
        %v463 = vmax.f32 %v331, %v417
        %v464 = vmax.f32 %v333, %v419
        %v465 = vmax.f32 %v372, %v458
        %s466 = scalar_lea.vmem %s176, 8 [#allocation2]
        %v467 = vld [vmem:[%s466] sm:$0xf]
        %v469 = vsel %vm282, %v467, 0
        %471 = vmatprep.subr.bf16.mxu0 %v262
        %472 = vmatpush1.bf16.msra.mxu0 %v261
        %473 = vmatprep.subr.bf16.mxu0 %v265
        %474 = vmatpush1.bf16.msra.mxu0 %v264
        %475 = vmatprep.subr.bf16.mxu0 %v268
        %476 = vmatpush1.bf16.msra.mxu0 %v267
        %477 = vmatprep.subr.bf16.mxu0 %v291
        %478 = vmatpush1.bf16.msra.mxu0 %v288
        %479 = vmatprep.subr.bf16.mxu0 0
        %480 = vmatpush1.bf16.msra.mxu0 0
        %481 = vmatprep.subr.bf16.mxu0 0
        %482 = vmatpush1.bf16.msra.mxu0 0
        %483 = vmatprep.subr.bf16.mxu0 0
        %484 = vmatpush1.bf16.msra.mxu0 0
        %485 = vmatprep.subr.bf16.mxu0 0
        %486 = vmatpush1.bf16.msra.mxu0 0
        %487 = vmatprep.subr.bf16.mxu0 0
        %488 = vmatpush1.bf16.msra.mxu0 0
        %489 = vmatprep.subr.bf16.mxu0 0
        %490 = vmatpush1.bf16.msra.mxu0 0
        %491 = vmatprep.subr.bf16.mxu0 0
        %492 = vmatpush1.bf16.msra.mxu0 0
        %493 = vmatprep.subr.bf16.mxu0 0
        %494 = vmatpush1.bf16.msra.mxu0 0
        %495 = vmatprep.subr.bf16.mxu0 0
        %496 = vmatpush1.bf16.msra.mxu0 0
        %497 = vmatprep.subr.bf16.mxu0 0
        %498 = vmatpush1.bf16.msra.mxu0 0
        %499 = vmatprep.subr.bf16.mxu0 0
        %500 = vmatpush1.bf16.msra.mxu0 0
        %501 = vmatprep.subr.bf16.mxu0 0
        %502 = vmatpush1.bf16.msra.mxu0 0
        %503 = vmatprep.mubr.bf16.mxu0 0
        %504 = vmatmul.mubr.bf16.gmra.mrb[0].mxu0 %v469
        %v505 = vpop.f32.mrb[0].mxu0
        %v506 = vadd.f32 0.0, %v505
        %v507 = vpop.f32.mrb[0].mxu0
        %v508 = vadd.f32 0.0, %v507
        %v509 = vpop.f32.mrb[0].mxu0
        %v510 = vpop.f32.mrb[0].mxu0
        %511 = vdwg.mxu0
        %512 = vmatprep.subr.bf16.mxu0 0
        %513 = vmatpush1.bf16.msra.mxu0 %v263
        %514 = vmatprep.subr.bf16.mxu0 0
        %515 = vmatpush1.bf16.msra.mxu0 %v266
        %516 = vmatprep.subr.bf16.mxu0 0
        %517 = vmatpush1.bf16.msra.mxu0 %v269
        %518 = vmatprep.subr.bf16.mxu0 0
        %519 = vmatpush1.bf16.msra.mxu0 %v294
        %520 = vmatprep.subr.bf16.mxu0 0
        %521 = vmatpush1.bf16.msra.mxu0 0
        %522 = vmatprep.subr.bf16.mxu0 0
        %523 = vmatpush1.bf16.msra.mxu0 0
        %524 = vmatprep.subr.bf16.mxu0 0
        %525 = vmatpush1.bf16.msra.mxu0 0
        %526 = vmatprep.subr.bf16.mxu0 0
        %527 = vmatpush1.bf16.msra.mxu0 0
        %528 = vmatprep.subr.bf16.mxu0 0
        %529 = vmatpush1.bf16.msra.mxu0 0
        %530 = vmatprep.subr.bf16.mxu0 0
        %531 = vmatpush1.bf16.msra.mxu0 0
        %532 = vmatprep.subr.bf16.mxu0 0
        %533 = vmatpush1.bf16.msra.mxu0 0
        %534 = vmatprep.subr.bf16.mxu0 0
        %535 = vmatpush1.bf16.msra.mxu0 0
        %536 = vmatprep.subr.bf16.mxu0 0
        %537 = vmatpush1.bf16.msra.mxu0 0
        %538 = vmatprep.subr.bf16.mxu0 0
        %539 = vmatpush1.bf16.msra.mxu0 0
        %540 = vmatprep.subr.bf16.mxu0 0
        %541 = vmatpush1.bf16.msra.mxu0 0
        %542 = vmatprep.subr.bf16.mxu0 0
        %543 = vmatpush1.bf16.msra.mxu0 0
        %544 = vmatprep.mubr.bf16.mxu0 0
        %545 = vmatmul.mubr.bf16.gmra.mrb[0].mxu0 %v469
        %v546 = vpop.f32.mrb[0].mxu0
        %v547 = vadd.f32 0.0, %v546
        %v548 = vpop.f32.mrb[0].mxu0
        %v549 = vpop.f32.mrb[0].mxu0
        %v550 = vpop.f32.mrb[0].mxu0
        %551 = vdwg.mxu0
        %v552 = vmax.f32 %v463, %v506
        %v553 = vmax.f32 %v464, %v508
        %v554 = vmax.f32 %v465, %v547
        %v555 = vld [vmem:[%s2] sm:$0x7]
        %v557 = vlaneseq
        %v558 = vshrl.u32 %v557, 7
        %v559 = vsub.s32 0, %v558
        %v560 = vrot.slane %v555, %v559
        %v561 = vlaneseq
        %v562 = vshrl.u32 %v561, 7
        %v563 = vsub.s32 1, %v562
        %v564 = vrot.slane %v555, %v563
        %v565 = vlaneseq
        %v566 = vshrl.u32 %v565, 7
        %v567 = vsub.s32 2, %v566
        %v568 = vrot.slane %v555, %v567
        %v572 = vadd.f32 %v552, %v560
        %v573 = vadd.f32 %v553, %v564
        %v574 = vadd.f32 %v554, %v568
        %v575 = vmax.f32 %v572, 0.0
        %v576 = vmax.f32 %v573, 0.0
        %v577 = vmax.f32 %v574, 0.0
        %v578 = vpack.c.bf16 %v575, %v575
        %v579 = vpack.c.bf16 %v576, %v576
        %v580 = vpack.c.bf16 %v577, %v577
        %v584 = vunpack.c.l.b16 %v578
        %v585 = vunpack.c.l.b16 %v579
        %v586 = vunpack.c.l.b16 %v580
        %v587 = vpack.c.b16 %v585, %v584
        %v588 = vpack.c.b16 %v586, %v586
        %591 = vst [vmem:[%s202] sm:$0xff] %v587
        %vm592 = vcmask 519168
        %593 = vst.msk [vmem:[%s202 + $0x8] sm:$0xf] %vm592, %v588
        %s594 = sand.u32 %s97, 1
        %s595 = scalar_lea.sflag [#allocation4], %s594
        %s596 = sand.u32 %s97, 1
        %s597 = smul.addr %s596, 12
        %s598 = scalar_lea.vmem [#allocation7], %s597
        // Predicated region
        $region41: #{tpu_custom_call.1} parent=31 // pred_check
          %p599 = pneg %p107
        $region42: #{tpu_custom_call.1} parent=31 // pred_check_branch
          %601 = sbr.rel (%p599) target = $region44
        $region43: #{tpu_custom_call.1} parent=31 // pred_region
          %s603 = ssub.s32 192, 192
          %604 = vsyncadd %s595, %s603
          %s605 = smul.addr %s21, 3
          %s606 = smul.addr %s605, 64
          %s607 = scalar_lea.hbm %s3, %s606
          %s609 = sshll.u32 %s598, 4
          %s610 = int_to_ptr.vmem [resolvable:$true] %s609
          %612 = dma.vmem_to_hbm [thread:$0]  %s610, 192, %s607, %s595
        $region44: #{tpu_custom_call.1} parent=31 // pred_fallthru
          _
      $region32: #{tpu_custom_call.1} parent=5 // pred_fallthru
        _
      %p613 = scmp.le.s32.totalorder 2, %s16
      // Predicated region
      $region45: #{tpu_custom_call.1} parent=5 // pred_check
        %p614 = pneg %p613
      $region46: #{tpu_custom_call.1} parent=5 // pred_check_branch
        %616 = sbr.rel (%p614) target = $region48
      $region47: #{tpu_custom_call.1} parent=5 // pred_region
        %s617 = ssub.s32 %s16, 2
        // Predicated region
        $region49: #{tpu_custom_call.1} parent=47 // pred_check
          %p618 = pneg %p113
        $region50: #{tpu_custom_call.1} parent=47 // pred_check_branch
          %620 = sbr.rel (%p618) target = $region52
        $region51: #{tpu_custom_call.1} parent=47 // pred_region
          %s621 = sand.u32 %s98, 1
          %s622 = scalar_lea.sflag [#allocation4], %s621
          %s623 = sand.u32 %s98, 1
          %s624 = smul.addr %s623, 12
          %s625 = scalar_lea.vmem [#allocation7], %s624
          %626 = dma.done %s622, 192
        $region52: #{tpu_custom_call.1} parent=47 // pred_fallthru
          _
      $region48: #{tpu_custom_call.1} parent=5 // pred_fallthru
        _
    $region6: #{tpu_custom_call.1} parent=1 // loop_footer
      %s20 = sadd.s32 1, %s16
    $region7: #{tpu_custom_call.1} parent=1 // loop_footer_branch
      %15 = sbr.rel target = $region3
    $region8: #{tpu_custom_call.1} parent=1 // loop_exit
      _
    %627 = vsyncpa [#allocation3], 1
    %s628 = scalar_lea.sflag [#allocation3], 1
    %629 = vsyncpa %s628, 1
    %630 = vsyncpa [#allocation6], 1
    %631 = vsyncpa [#allocation4], 1
    %s632 = scalar_lea.sflag [#allocation4], 1
    %633 = vsyncpa %s632, 1

</llo_original>
